<compile_context>
chip_gen: v7x
topology: tpu7x:2x2x1
jax: 0.10.0
libtpu: 0.0.40
codegen_flags: <defaults>
</compile_context>

<pallas_src>
import numpy as np
import jax
import jax.numpy as jnp
from jax.experimental import pallas as pl
from jax.experimental.pallas import tpu as pltpu


def _condensing_sfr_kernel(x_ref, scale_ref, shift_ref, w_ref, o_ref):
    # x_ref:     (Cin, T)  pixels-on-lanes tile (batch dim squeezed away).
    # scale/shift: (Cin, 1) folded BatchNorm parameters (broadcast over lanes).
    # w_ref:     (Cout, Cin) pre-folded (shuffle + grouped conv + index) weight.
    # o_ref:     (Cout, T)  lane-dense output tile.
    x = x_ref[...].astype(jnp.float32)
    xn = x * scale_ref[...] + shift_ref[...]                  # folded BatchNorm
    act = xn * jnp.clip(xn + 3.0, 0.0, 6.0) * (1.0 / 6.0)     # HS activation

    w = w_ref[...].astype(jnp.float32)
    cout, cin = w.shape
    if cin <= 32 and cout <= 32:
        # Tiny channel mix: Cin broadcast-FMAs over full-lane vregs on the VPU
        # instead of a degenerate (<<128-wide) MXU matmul.
        z = w[:, 0:1] * act[0:1, :]
        for c in range(1, cin):
            z = z + w[:, c:c + 1] * act[c:c + 1, :]
    else:
        # Large channel counts: use the MXU.
        z = jnp.dot(w, act, preferred_element_type=jnp.float32)

    o_ref[...] = z.astype(o_ref.dtype)


def _round_up(a, b):
    return (a + b - 1) // b * b


def condensing_sfr_forward(x_nchw, scale, shift, w_t, *, tile_hw=1024):
    """Fused SFR forward.

    x_nchw: (N, Cin, H, W); scale/shift: (Cin,) folded BN; w_t: (Cout, Cin)
    combined weight (shuffle + grouped 1x1 conv + index mix, transposed).
    """
    N, Cin, H, W = x_nchw.shape
    Cout = w_t.shape[0]
    HW = H * W

    # NCHW viewed as (N, Cin, HW) is a free reshape -- no transpose passes.
    x = x_nchw.reshape(N, Cin, HW)

    # Lane-axis tile: multiple of 128, as large as useful, capped by the
    # (128-rounded) per-image spatial extent.
    tile_hw = max(128, _round_up(min(tile_hw, _round_up(HW, 128)), 128))
    pad = (-HW) % tile_hw
    if pad:  # only when HW isn't a multiple of the tile (not hit in the test)
        x = jnp.pad(x, ((0, 0), (0, 0), (0, pad)))
    HWp = HW + pad

    out = pl.pallas_call(
        _condensing_sfr_kernel,
        out_shape=jax.ShapeDtypeStruct((N, Cout, HWp), x_nchw.dtype),
        grid_spec=pltpu.PrefetchScalarGridSpec(
            num_scalar_prefetch=0,
            grid=(N, HWp // tile_hw),
            in_specs=[
                pl.BlockSpec((None, Cin, tile_hw), lambda n, j: (n, 0, j)),
                pl.BlockSpec((Cin, 1), lambda n, j: (0, 0)),
                pl.BlockSpec((Cin, 1), lambda n, j: (0, 0)),
                pl.BlockSpec((Cout, Cin), lambda n, j: (0, 0)),
            ],
            out_specs=pl.BlockSpec((None, Cout, tile_hw), lambda n, j: (n, 0, j)),
        ),
        compiler_params=pltpu.CompilerParams(
            dimension_semantics=("parallel", "parallel"),
            vmem_limit_bytes=32 * 1024 * 1024,
        ),
    )(x, scale.reshape(Cin, 1), shift.reshape(Cin, 1), w_t)

    if pad:
        out = out[:, :, :HW]
    return out.reshape(N, Cout, H, W)


def build_dense_shuffled_weight(conv_w, in_channels, out_channels, groups):
    """Fold ShuffleLayerTrans + grouped 1x1 conv into one (Cin, Cout) matrix.

    conv_w: (Cout, Cin // groups) squeezed 1x1 grouped-conv weight.
    Shuffled channel j*cp+k == original channel k*groups+j (cp = Cin//groups).
    Output channel o (group go = o // (Cout//groups)) reads shuffled channels
    go*cp + k, i.e. original channels k*groups + go.
    """
    cpg_in = in_channels // groups
    cpg_out = out_channels // groups
    w_dense = np.zeros((in_channels, out_channels), np.float32)
    for o in range(out_channels):
        go = o // cpg_out
        for k in range(cpg_in):
            orig = k * groups + go
            w_dense[orig, o] = conv_w[o, k]
    return jnp.asarray(w_dense)


def reference_forward(x, gamma, beta, mean, var, conv_w, index, groups, eps=1e-5):
    # Plain-JAX reference mirroring the PyTorch forward (eval-mode BN).
    xn = (x - mean[None, :, None, None]) / jnp.sqrt(var[None, :, None, None] + eps)
    xn = xn * gamma[None, :, None, None] + beta[None, :, None, None]
    a = xn * jnp.clip(xn + 3.0, 0.0, 6.0) / 6.0
    N, C, H, W = a.shape
    cp = C // groups
    a = a.reshape(N, cp, groups, H, W).transpose(0, 2, 1, 3, 4).reshape(N, C, H, W)
    Cout = conv_w.shape[0]
    cpg_out = Cout // groups
    cpg_in = C // groups
    outs = []
    for g in range(groups):
        xg = a[:, g * cpg_in:(g + 1) * cpg_in]
        wg = conv_w[g * cpg_out:(g + 1) * cpg_out]
        outs.append(jnp.einsum('nchw,oc->nohw', xg, wg))
    y = jnp.concatenate(outs, axis=1)
    return jnp.einsum('nchw,cd->ndhw', y, index)


if __name__ == "__main__":
    # Module hyper-parameters (synthetic):
    N, H, W = 2, 16, 16
    in_channels = 8
    groups = 4
    condense_factor = 4
    model_out_channels = 8                                   # model.conv.out_channels
    out_channels = model_out_channels * groups // condense_factor  # == 8

    key = jax.random.PRNGKey(0)
    kx, kg, kb, km, kv, kw, ki = jax.random.split(key, 7)

    x = jax.random.normal(kx, (N, in_channels, H, W), jnp.float32)

    # BatchNorm2d params / running stats (deterministic synthetic init).
    gamma = jax.random.uniform(kg, (in_channels,), jnp.float32, 0.5, 1.5)
    beta = jax.random.normal(kb, (in_channels,), jnp.float32) * 0.1
    running_mean = jax.random.normal(km, (in_channels,), jnp.float32) * 0.1
    running_var = jax.random.uniform(kv, (in_channels,), jnp.float32, 0.5, 1.5)
    eps = 1e-5

    # Grouped 1x1 conv weight: (Cout, Cin//groups) [kernel dims squeezed].
    conv_w = jax.random.normal(kw, (out_channels, in_channels // groups),
                               jnp.float32) * 0.2

    # Synthetic `index` buffer (Cout, Cout) of 0/1 selections.
    index = jax.random.bernoulli(ki, 0.3, (out_channels, out_channels)).astype(
        jnp.float32)

    # Fold BN into per-channel scale/shift (inference semantics).
    scale = gamma / jnp.sqrt(running_var + eps)
    shift = beta - running_mean * scale

    # Fold shuffle + grouping into a dense (Cin, Cout) weight, then fold the
    # constant `index` channel mix into it and transpose -> (Cout, Cin).
    w_dense = build_dense_shuffled_weight(np.asarray(conv_w),
                                          in_channels, out_channels, groups)
    w_t = (w_dense @ index).T

    out = condensing_sfr_forward(x, scale, shift, w_t)
    out = jax.block_until_ready(out)

    ref = reference_forward(x, gamma, beta, running_mean, running_var,
                            conv_w, index, groups, eps)
    ref = jax.block_until_ready(ref)

    assert out.shape == (N, out_channels, H, W), out.shape
    np.testing.assert_allclose(np.asarray(out), np.asarray(ref),
                               rtol=1e-4, atol=1e-5)
    print("KERNEL_OK")
</pallas_src>

<mosaic_0001>
module attributes {stable_mosaic.version = 11 : i64} {
  func.func @_condensing_sfr_kernel(%arg0: i32, %arg1: i32, %arg2: memref<1x8x256xf32, #tpu.memory_space<vmem>>, %arg3: memref<8x1xf32, #tpu.memory_space<vmem>>, %arg4: memref<8x1xf32, #tpu.memory_space<vmem>>, %arg5: memref<8x8xf32, #tpu.memory_space<vmem>>, %arg6: memref<1x8x256xf32, #tpu.memory_space<vmem>>) attributes {dimension_semantics = [#tpu.dimension_semantics<parallel>, #tpu.dimension_semantics<parallel>], iteration_bounds = array<i64: 2, 1>, scalar_prefetch = 0 : i64, scratch_operands = 0 : i64, tpu.core_type = #tpu.core_type<tc>, window_params = [{transform_indices = @transform_0, window_bounds = array<i64: 1, 8, 256>}, {pipeline_mode = #tpu.pipeline_mode<synchronous>, transform_indices = @transform_1, window_bounds = array<i64: 8, 1>}, {pipeline_mode = #tpu.pipeline_mode<synchronous>, transform_indices = @transform_2, window_bounds = array<i64: 8, 1>}, {pipeline_mode = #tpu.pipeline_mode<synchronous>, transform_indices = @transform_3, window_bounds = array<i64: 8, 8>}, {transform_indices = @transform_4, window_bounds = array<i64: 1, 8, 256>}]} {
    %c0 = arith.constant 0 : index
    %c0_0 = arith.constant 0 : index
    %c0_1 = arith.constant 0 : index
    %0 = vector.load %arg2[%c0, %c0_0, %c0_1] : memref<1x8x256xf32, #tpu.memory_space<vmem>>, vector<1x8x256xf32>
    %1 = vector.shape_cast %0 : vector<1x8x256xf32> to vector<8x256xf32>
    %c0_2 = arith.constant 0 : index
    %c0_3 = arith.constant 0 : index
    %2 = vector.load %arg3[%c0_2, %c0_3] : memref<8x1xf32, #tpu.memory_space<vmem>>, vector<8x1xf32>
    %3 = vector.broadcast %2 : vector<8x1xf32> to vector<8x256xf32>
    %4 = arith.mulf %1, %3 : vector<8x256xf32>
    %c0_4 = arith.constant 0 : index
    %c0_5 = arith.constant 0 : index
    %5 = vector.load %arg4[%c0_4, %c0_5] : memref<8x1xf32, #tpu.memory_space<vmem>>, vector<8x1xf32>
    %6 = vector.broadcast %5 : vector<8x1xf32> to vector<8x256xf32>
    %7 = arith.addf %4, %6 : vector<8x256xf32>
    %cst = arith.constant 3.000000e+00 : f32
    %8 = vector.broadcast %cst : f32 to vector<8x256xf32>
    %9 = arith.addf %7, %8 : vector<8x256xf32>
    %cst_6 = arith.constant 0.000000e+00 : f32
    %cst_7 = arith.constant 6.000000e+00 : f32
    %10 = vector.broadcast %cst_6 : f32 to vector<8x256xf32>
    %11 = arith.maximumf %10, %9 : vector<8x256xf32>
    %12 = vector.broadcast %cst_7 : f32 to vector<8x256xf32>
    %13 = arith.minimumf %12, %11 : vector<8x256xf32>
    %14 = arith.mulf %7, %13 : vector<8x256xf32>
    %cst_8 = arith.constant 0.166666672 : f32
    %15 = vector.broadcast %cst_8 : f32 to vector<8x256xf32>
    %16 = arith.mulf %14, %15 : vector<8x256xf32>
    %c0_9 = arith.constant 0 : index
    %c0_10 = arith.constant 0 : index
    %17 = vector.load %arg5[%c0_9, %c0_10] : memref<8x8xf32, #tpu.memory_space<vmem>>, vector<8x8xf32>
    %18 = vector.extract_strided_slice %17 {offsets = [0, 0], sizes = [8, 1], strides = [1, 1]} : vector<8x8xf32> to vector<8x1xf32>
    %19 = vector.extract_strided_slice %16 {offsets = [0, 0], sizes = [1, 256], strides = [1, 1]} : vector<8x256xf32> to vector<1x256xf32>
    %20 = vector.broadcast %18 : vector<8x1xf32> to vector<8x256xf32>
    %21 = vector.broadcast %19 : vector<1x256xf32> to vector<8x256xf32>
    %22 = arith.mulf %20, %21 : vector<8x256xf32>
    %23 = vector.extract_strided_slice %17 {offsets = [0, 1], sizes = [8, 1], strides = [1, 1]} : vector<8x8xf32> to vector<8x1xf32>
    %24 = vector.extract_strided_slice %16 {offsets = [1, 0], sizes = [1, 256], strides = [1, 1]} : vector<8x256xf32> to vector<1x256xf32>
    %25 = vector.broadcast %23 : vector<8x1xf32> to vector<8x256xf32>
    %26 = vector.broadcast %24 : vector<1x256xf32> to vector<8x256xf32>
    %27 = arith.mulf %25, %26 : vector<8x256xf32>
    %28 = arith.addf %22, %27 : vector<8x256xf32>
    %29 = vector.extract_strided_slice %17 {offsets = [0, 2], sizes = [8, 1], strides = [1, 1]} : vector<8x8xf32> to vector<8x1xf32>
    %30 = vector.extract_strided_slice %16 {offsets = [2, 0], sizes = [1, 256], strides = [1, 1]} : vector<8x256xf32> to vector<1x256xf32>
    %31 = vector.broadcast %29 : vector<8x1xf32> to vector<8x256xf32>
    %32 = vector.broadcast %30 : vector<1x256xf32> to vector<8x256xf32>
    %33 = arith.mulf %31, %32 : vector<8x256xf32>
    %34 = arith.addf %28, %33 : vector<8x256xf32>
    %35 = vector.extract_strided_slice %17 {offsets = [0, 3], sizes = [8, 1], strides = [1, 1]} : vector<8x8xf32> to vector<8x1xf32>
    %36 = vector.extract_strided_slice %16 {offsets = [3, 0], sizes = [1, 256], strides = [1, 1]} : vector<8x256xf32> to vector<1x256xf32>
    %37 = vector.broadcast %35 : vector<8x1xf32> to vector<8x256xf32>
    %38 = vector.broadcast %36 : vector<1x256xf32> to vector<8x256xf32>
    %39 = arith.mulf %37, %38 : vector<8x256xf32>
    %40 = arith.addf %34, %39 : vector<8x256xf32>
    %41 = vector.extract_strided_slice %17 {offsets = [0, 4], sizes = [8, 1], strides = [1, 1]} : vector<8x8xf32> to vector<8x1xf32>
    %42 = vector.extract_strided_slice %16 {offsets = [4, 0], sizes = [1, 256], strides = [1, 1]} : vector<8x256xf32> to vector<1x256xf32>
    %43 = vector.broadcast %41 : vector<8x1xf32> to vector<8x256xf32>
    %44 = vector.broadcast %42 : vector<1x256xf32> to vector<8x256xf32>
    %45 = arith.mulf %43, %44 : vector<8x256xf32>
    %46 = arith.addf %40, %45 : vector<8x256xf32>
    %47 = vector.extract_strided_slice %17 {offsets = [0, 5], sizes = [8, 1], strides = [1, 1]} : vector<8x8xf32> to vector<8x1xf32>
    %48 = vector.extract_strided_slice %16 {offsets = [5, 0], sizes = [1, 256], strides = [1, 1]} : vector<8x256xf32> to vector<1x256xf32>
    %49 = vector.broadcast %47 : vector<8x1xf32> to vector<8x256xf32>
    %50 = vector.broadcast %48 : vector<1x256xf32> to vector<8x256xf32>
    %51 = arith.mulf %49, %50 : vector<8x256xf32>
    %52 = arith.addf %46, %51 : vector<8x256xf32>
    %53 = vector.extract_strided_slice %17 {offsets = [0, 6], sizes = [8, 1], strides = [1, 1]} : vector<8x8xf32> to vector<8x1xf32>
    %54 = vector.extract_strided_slice %16 {offsets = [6, 0], sizes = [1, 256], strides = [1, 1]} : vector<8x256xf32> to vector<1x256xf32>
    %55 = vector.broadcast %53 : vector<8x1xf32> to vector<8x256xf32>
    %56 = vector.broadcast %54 : vector<1x256xf32> to vector<8x256xf32>
    %57 = arith.mulf %55, %56 : vector<8x256xf32>
    %58 = arith.addf %52, %57 : vector<8x256xf32>
    %59 = vector.extract_strided_slice %17 {offsets = [0, 7], sizes = [8, 1], strides = [1, 1]} : vector<8x8xf32> to vector<8x1xf32>
    %60 = vector.extract_strided_slice %16 {offsets = [7, 0], sizes = [1, 256], strides = [1, 1]} : vector<8x256xf32> to vector<1x256xf32>
    %61 = vector.broadcast %59 : vector<8x1xf32> to vector<8x256xf32>
    %62 = vector.broadcast %60 : vector<1x256xf32> to vector<8x256xf32>
    %63 = arith.mulf %61, %62 : vector<8x256xf32>
    %64 = arith.addf %58, %63 : vector<8x256xf32>
    %c0_11 = arith.constant 0 : index
    %c0_12 = arith.constant 0 : index
    %c0_13 = arith.constant 0 : index
    %65 = vector.load %arg6[%c0_11, %c0_12, %c0_13] : memref<1x8x256xf32, #tpu.memory_space<vmem>>, vector<1x8x256xf32>
    %66 = vector.shape_cast %65 : vector<1x8x256xf32> to vector<8x256xf32>
    %67 = vector.shape_cast %64 : vector<8x256xf32> to vector<1x8x256xf32>
    tpu.vector_store %arg6[%c0_11, %c0_12, %c0_13], %67 {strides = array<i32>} : memref<1x8x256xf32, #tpu.memory_space<vmem>>, vector<1x8x256xf32>,
    return
  }
  func.func @transform_0(%arg0: i32, %arg1: i32) -> (i32, i32, i32) {
    %c0_i32 = arith.constant 0 : i32
    %c0_i32_0 = arith.constant 0 : i32
    return %arg0, %c0_i32, %arg1 : i32, i32, i32
  }
  func.func @transform_1(%arg0: i32, %arg1: i32) -> (i32, i32) {
    %c0_i32 = arith.constant 0 : i32
    %c0_i32_0 = arith.constant 0 : i32
    %c0_i32_1 = arith.constant 0 : i32
    return %c0_i32, %c0_i32_0 : i32, i32
  }
  func.func @transform_2(%arg0: i32, %arg1: i32) -> (i32, i32) {
    %c0_i32 = arith.constant 0 : i32
    %c0_i32_0 = arith.constant 0 : i32
    %c0_i32_1 = arith.constant 0 : i32
    return %c0_i32, %c0_i32_0 : i32, i32
  }
  func.func @transform_3(%arg0: i32, %arg1: i32) -> (i32, i32) {
    %c0_i32 = arith.constant 0 : i32
    %c0_i32_0 = arith.constant 0 : i32
    %c0_i32_1 = arith.constant 0 : i32
    return %c0_i32, %c0_i32_0 : i32, i32
  }
  func.func @transform_4(%arg0: i32, %arg1: i32) -> (i32, i32, i32) {
    %c0_i32 = arith.constant 0 : i32
    %c0_i32_0 = arith.constant 0 : i32
    return %arg0, %c0_i32, %arg1 : i32, i32, i32
  }
}

</mosaic_0001>

<llo_original>
// kernel: tpu_custom_call.1
$region0: #{tpu_custom_call.1}
  #allocation0 [shape = 'u32[]', space=smem, size = 0x4, offset = 0x4, fixed_abs, tag = 'smem constant byte address 0x4 - core index']
  #allocation1 [shape = 'u32[144,128]{1,0:T(1,128)}', space=vmem, size = 0x12000, scoped, tag = 'internal scratch']
  %s0 = inlined_call_operand.hbm [shape: f32[2,8,256], index: 0, kind: input, shape index: {}]
  %s1 = inlined_call_operand.vmem [shape: f32[8,1], index: 1, kind: input, shape index: {}]
  %s2 = inlined_call_operand.vmem [shape: f32[8,1], index: 2, kind: input, shape index: {}]
  %s3 = inlined_call_operand.vmem [shape: f32[8,8], index: 3, kind: input, shape index: {}]
  %s4 = inlined_call_operand.hbm [shape: f32[2,8,256], index: 4, kind: output, shape index: {}]
  %s5 = sld [smem:[#allocation0]]
  $region53: #{tpu_custom_call.1} parent=0
    _
  %s7 = ssub.s32 1, %s5
  %s8 = scalar_select 0, %s7, %s5
  $region1: #{tpu_custom_call.1} parent=0
    #allocation2 [shape = 'u8[16384]{0}', space=vmem, size = 0x4000, scoped, tag = 'input window, operand 0']
    #allocation3 [shape = 's32[2]{0}', space=sflag, size = 0x8, scoped, tag = 'scoped memory for tpu_custom_call.1']
    #allocation4 [shape = 's32[2]{0}', space=sflag, size = 0x8, scoped, tag = 'scoped memory for tpu_custom_call.1']
    #allocation5 [shape = 'u8[16384]{0}', space=vmem, size = 0x4000, scoped, tag = 'output window, operand 0']
    %9 = vsyncpa [#allocation3], 0
    %s10 = scalar_lea.sflag [#allocation3], 1
    %11 = vsyncpa %s10, 0
    %12 = vsyncpa [#allocation4], 0
    %s13 = scalar_lea.sflag [#allocation4], 1
    %14 = vsyncpa %s13, 0
    loop: start=0, step=1, limit=4
    $region2: #{tpu_custom_call.1} parent=1 // loop_pre_header
      _
    $region3: #{tpu_custom_call.1} parent=1 // loop_header
      %s16 = sphi 0, %s20
      %p17 = scmp.ge.s32.totalorder %s16, 4
      %s23 = sphi 0, %s35
      %s24 = sphi 0, %s31
      %s25 = sphi 0, %s23
      %s26 = sphi 0, %s24
      %s27 = sphi 0, %s25
      %s28 = sphi 0, %s26
      %s40 = sphi 0, %s42
      %s43 = sphi 0, %s40
      %s44 = sphi 0, %s43
      %s60 = sphi 0, %s44
      %s64 = sphi 0, %s64
      %s66 = sphi 0, %s64
      %s67 = sphi 0, %s66
      %s81 = sphi 0, %s67
      %s85 = sphi 0, %s85
      %s87 = sphi 0, %s85
      %s88 = sphi 0, %s87
      %s102 = sphi 0, %s88
      %s106 = sphi 0, %s106
      %s108 = sphi 0, %s106
      %s109 = sphi 0, %s108
      %s123 = sphi 0, %s109
      %s131 = sphi 0, %s133
      %s134 = sphi 0, %s131
      %s135 = sphi 0, %s134
      %s151 = sphi 0, %s135
    $region4: #{tpu_custom_call.1} parent=1 // loop_header_branch
      %19 = sbr.rel (%p17) target = $region8
    $region5: #{tpu_custom_call.1} parent=1 // loop_body
      %s21 = ssub.s32 %s16, 1
      %s22 = ssub.s32 %s16, 2
      %s29 = sadd.s32 1, %s24
      %p30 = scmp.ge.s32.totalorder %s29, 1
      %s31 = scalar_select %p30, 0, %s29
      %s32 = sadd.s32 1, %s23
      %s33 = scalar_select %p30, %s32, %s23
      %p34 = scmp.ge.s32.totalorder %s33, 2
      %s35 = scalar_select %p34, 0, %s33
      %s36 = ssub.s32 %s23, %s35
      %s37 = ssub.s32 %s24, %s31
      %s38 = sor.u32 %s36, %s37
      %p39 = scmp.eq.s32.totalorder %s38, 0
      %s41 = sadd.s32 %s40, 1
      %s42 = scalar_select %p39, %s40, %s41
      %p45 = pneg %p39
      %p46 = scmp.eq.s32.totalorder %s16, 1
      %p47 = por %p45, %p46
      %p48 = scmp.ne.s32.totalorder %s40, %s43
      %p49 = scmp.eq.s32.totalorder %s16, 0
      %p50 = por %p48, %p49
      %p51 = scmp.ne.s32.totalorder %s40, %s43
      %p52 = scmp.eq.s32.totalorder %s21, 1
      %p53 = por %p51, %p52
      %p54 = scmp.ne.s32.totalorder %s43, %s44
      %p55 = scmp.eq.s32.totalorder %s21, 0
      %p56 = por %p54, %p55
      %p57 = scmp.ne.s32.totalorder %s43, %s44
      %p58 = scmp.eq.s32.totalorder %s22, 1
      %p59 = por %p57, %p58
      %p61 = scmp.ne.s32.totalorder %s44, %s60
      %p62 = scmp.eq.s32.totalorder %s22, 0
      %p63 = por %p61, %p62
      %s65 = sadd.s32 %s64, 1
      %p68 = scmp.eq.s32.totalorder %s16, 1
      %p69 = scmp.ne.s32.totalorder %s64, %s66
      %p70 = scmp.eq.s32.totalorder %s16, 0
      %p71 = por %p69, %p70
      %p72 = scmp.ne.s32.totalorder %s64, %s66
      %p73 = scmp.eq.s32.totalorder %s21, 1
      %p74 = por %p72, %p73
      %p75 = scmp.ne.s32.totalorder %s66, %s67
      %p76 = scmp.eq.s32.totalorder %s21, 0
      %p77 = por %p75, %p76
      %p78 = scmp.ne.s32.totalorder %s66, %s67
      %p79 = scmp.eq.s32.totalorder %s22, 1
      %p80 = por %p78, %p79
      %p82 = scmp.ne.s32.totalorder %s67, %s81
      %p83 = scmp.eq.s32.totalorder %s22, 0
      %p84 = por %p82, %p83
      %s86 = sadd.s32 %s85, 1
      %p89 = scmp.eq.s32.totalorder %s16, 1
      %p90 = scmp.ne.s32.totalorder %s85, %s87
      %p91 = scmp.eq.s32.totalorder %s16, 0
      %p92 = por %p90, %p91
      %p93 = scmp.ne.s32.totalorder %s85, %s87
      %p94 = scmp.eq.s32.totalorder %s21, 1
      %p95 = por %p93, %p94
      %p96 = scmp.ne.s32.totalorder %s87, %s88
      %p97 = scmp.eq.s32.totalorder %s21, 0
      %p98 = por %p96, %p97
      %p99 = scmp.ne.s32.totalorder %s87, %s88
      %p100 = scmp.eq.s32.totalorder %s22, 1
      %p101 = por %p99, %p100
      %p103 = scmp.ne.s32.totalorder %s88, %s102
      %p104 = scmp.eq.s32.totalorder %s22, 0
      %p105 = por %p103, %p104
      %s107 = sadd.s32 %s106, 1
      %p110 = scmp.eq.s32.totalorder %s16, 1
      %p111 = scmp.ne.s32.totalorder %s106, %s108
      %p112 = scmp.eq.s32.totalorder %s16, 0
      %p113 = por %p111, %p112
      %p114 = scmp.ne.s32.totalorder %s106, %s108
      %p115 = scmp.eq.s32.totalorder %s21, 1
      %p116 = por %p114, %p115
      %p117 = scmp.ne.s32.totalorder %s108, %s109
      %p118 = scmp.eq.s32.totalorder %s21, 0
      %p119 = por %p117, %p118
      %p120 = scmp.ne.s32.totalorder %s108, %s109
      %p121 = scmp.eq.s32.totalorder %s22, 1
      %p122 = por %p120, %p121
      %p124 = scmp.ne.s32.totalorder %s109, %s123
      %p125 = scmp.eq.s32.totalorder %s22, 0
      %p126 = por %p124, %p125
      %s127 = ssub.s32 %s23, %s35
      %s128 = ssub.s32 %s24, %s31
      %s129 = sor.u32 %s127, %s128
      %p130 = scmp.eq.s32.totalorder %s129, 0
      %s132 = sadd.s32 %s131, 1
      %s133 = scalar_select %p130, %s131, %s132
      %p136 = pneg %p130
      %p137 = scmp.eq.s32.totalorder %s16, 1
      %p138 = por %p136, %p137
      %p139 = scmp.ne.s32.totalorder %s131, %s134
      %p140 = scmp.eq.s32.totalorder %s16, 0
      %p141 = por %p139, %p140
      %p142 = scmp.ne.s32.totalorder %s131, %s134
      %p143 = scmp.eq.s32.totalorder %s21, 1
      %p144 = por %p142, %p143
      %p145 = scmp.ne.s32.totalorder %s134, %s135
      %p146 = scmp.eq.s32.totalorder %s21, 0
      %p147 = por %p145, %p146
      %p148 = scmp.ne.s32.totalorder %s134, %s135
      %p149 = scmp.eq.s32.totalorder %s22, 1
      %p150 = por %p148, %p149
      %p152 = scmp.ne.s32.totalorder %s135, %s151
      %p153 = scmp.eq.s32.totalorder %s22, 0
      %p154 = por %p152, %p153
      %p155 = scmp.le.s32.totalorder 1, %s16
      %p156 = scmp.lt.s32.totalorder %s16, 3
      %p157 = pnand %p155, %p156
      %p158 = pneg %p157
      // Predicated region
      $region9: #{tpu_custom_call.1} parent=5 // pred_check
        _
      $region10: #{tpu_custom_call.1} parent=5 // pred_check_branch
        %160 = sbr.rel (%p157) target = $region12
      $region11: #{tpu_custom_call.1} parent=5 // pred_region
        %s161 = ssub.s32 %s16, 1
        // Predicated region
        $region13: #{tpu_custom_call.1} parent=11 // pred_check
          %p162 = pneg %p77
        $region14: #{tpu_custom_call.1} parent=11 // pred_check_branch
          %164 = sbr.rel (%p162) target = $region16
        $region15: #{tpu_custom_call.1} parent=11 // pred_region
          _
        $region16: #{tpu_custom_call.1} parent=11 // pred_fallthru
          _
        // Predicated region
        $region17: #{tpu_custom_call.1} parent=11 // pred_check
          %p165 = pneg %p98
        $region18: #{tpu_custom_call.1} parent=11 // pred_check_branch
          %167 = sbr.rel (%p165) target = $region20
        $region19: #{tpu_custom_call.1} parent=11 // pred_region
          _
        $region20: #{tpu_custom_call.1} parent=11 // pred_fallthru
          _
        // Predicated region
        $region21: #{tpu_custom_call.1} parent=11 // pred_check
          %p168 = pneg %p119
        $region22: #{tpu_custom_call.1} parent=11 // pred_check_branch
          %170 = sbr.rel (%p168) target = $region24
        $region23: #{tpu_custom_call.1} parent=11 // pred_region
          _
        $region24: #{tpu_custom_call.1} parent=11 // pred_fallthru
          _
      $region12: #{tpu_custom_call.1} parent=5 // pred_fallthru
        _
      %p171 = scmp.lt.s32.totalorder %s16, 2
      // Predicated region
      $region25: #{tpu_custom_call.1} parent=5 // pred_check
        %p172 = pneg %p171
      $region26: #{tpu_custom_call.1} parent=5 // pred_check_branch
        %174 = sbr.rel (%p172) target = $region28
      $region27: #{tpu_custom_call.1} parent=5 // pred_region
        // Predicated region
        $region29: #{tpu_custom_call.1} parent=27 // pred_check
          %p175 = pneg %p50
        $region30: #{tpu_custom_call.1} parent=27 // pred_check_branch
          %177 = sbr.rel (%p175) target = $region32
        $region31: #{tpu_custom_call.1} parent=27 // pred_region
          %s178 = sand.u32 %s40, 1
          %s179 = scalar_lea.sflag [#allocation3], %s178
          %s180 = sand.u32 %s40, 1
          %s181 = smul.addr %s180, 16
          %s182 = scalar_lea.vmem [#allocation2], %s181
          %s183 = smul.u32 2, %s24
          %s185 = ssub.s32 256, 256
          %186 = vsyncadd %s179, %s185
          %s187 = smul.addr %s23, 2
          %s188 = sadd.s32 %s183, %s187
          %s189 = smul.addr %s188, 128
          %s190 = scalar_lea.hbm %s0, %s189
          %s192 = sshll.u32 %s182, 4
          %s193 = int_to_ptr.vmem [resolvable:$true] %s192
          %195 = dma.hbm_to_vmem [thread:$0]  %s190, 256, %s193, %s179
        $region32: #{tpu_custom_call.1} parent=27 // pred_fallthru
          _
      $region28: #{tpu_custom_call.1} parent=5 // pred_fallthru
        _
      %p196 = scmp.le.s32.totalorder 1, %s16
      %p197 = scmp.lt.s32.totalorder %s16, 3
      %p198 = pnand %p196, %p197
      %p199 = pneg %p198
      // Predicated region
      $region33: #{tpu_custom_call.1} parent=5 // pred_check
        _
      $region34: #{tpu_custom_call.1} parent=5 // pred_check_branch
        %201 = sbr.rel (%p198) target = $region36
      $region35: #{tpu_custom_call.1} parent=5 // pred_region
        %s202 = ssub.s32 %s16, 1
        %s203 = sand.u32 %s43, 1
        %s204 = scalar_lea.sflag [#allocation3], %s203
        %s205 = sand.u32 %s43, 1
        %s206 = smul.addr %s205, 16
        %s207 = scalar_lea.vmem [#allocation2], %s206
        // Predicated region
        $region37: #{tpu_custom_call.1} parent=35 // pred_check
          %p208 = pneg %p56
        $region38: #{tpu_custom_call.1} parent=35 // pred_check_branch
          %210 = sbr.rel (%p208) target = $region40
        $region39: #{tpu_custom_call.1} parent=35 // pred_region
          %211 = dma.done %s204, 256
        $region40: #{tpu_custom_call.1} parent=35 // pred_fallthru
          _
        %s212 = sand.u32 %s43, 1
        %s213 = scalar_lea.sflag [#allocation3], %s212
        %s214 = sand.u32 %s43, 1
        %s215 = smul.addr %s214, 16
        %s216 = scalar_lea.vmem [#allocation2], %s215
        %p217 = pneg %p56
        %p218 = pneg %p53
        %p219 = pneg %p77
        %p220 = pneg %p74
        %p221 = pneg %p98
        %p222 = pneg %p95
        %p223 = pneg %p119
        %p224 = pneg %p116
        %p225 = pneg %p147
        %p226 = pneg %p144
        %s227 = sand.u32 %s134, 1
        %s228 = scalar_lea.sflag [#allocation4], %s227
        %s229 = sand.u32 %s134, 1
        %s230 = smul.addr %s229, 16
        %s231 = scalar_lea.vmem [#allocation5], %s230
        %s232 = smul.u32 2, %s26
        %s233 = smul.u32 2, %s26
        %v234 = vld [vmem:[%s207] sm:$0xff]
        %v235 = vld [vmem:[%s207 + $0x8] sm:$0xff]
        %v236 = vld [vmem:[%s1] sm:$0xff]
        %238 = vset.pattern.permute.xlu0 0
        %239 = vperm.xlu0 %238, %v236
        %v240 = vpop.permute.xlu0 %239
        %v242 = vmul.f32 %v234, %v240
        %v243 = vmul.f32 %v235, %v240
        %v244 = vld [vmem:[%s2] sm:$0xff]
        %246 = vset.pattern.permute.xlu0 0
        %247 = vperm.xlu0 %246, %v244
        %v248 = vpop.permute.xlu0 %247
        %v250 = vadd.f32 %v242, %v248
        %v251 = vadd.f32 %v243, %v248
        %v252 = vadd.f32 %v250, 3.0
        %v253 = vadd.f32 %v251, 3.0
        %v254 = vmax.f32 %v252, 0.0
        %v255 = vmax.f32 %v253, 0.0
        %v256 = vmin.f32 %v254, 6.0
        %v257 = vmin.f32 %v255, 6.0
        %v258 = vmul.f32 %v250, %v256
        %v259 = vmul.f32 %v251, %v257
        %v260 = vmul.f32 %v258, 0.16666667
        %v261 = vmul.f32 %v259, 0.16666667
        %v262 = vld [vmem:[%s3] sm:$0xff]
        %264 = vset.pattern.permute.xlu0 0
        %265 = vperm.xlu0 %264, %v262
        %v266 = vpop.permute.xlu0 %265
        %v268 = vlaneseq
        %v269 = vshrl.u32 %v268, 7
        %v270 = vsub.s32 0, %v269
        %v271 = vrot.slane %v260, %v270
        %v272 = vlaneseq
        %v273 = vshrl.u32 %v272, 7
        %v274 = vsub.s32 0, %v273
        %v275 = vrot.slane %v261, %v274
        %v276 = vmul.f32 %v266, %v271
        %v277 = vmul.f32 %v266, %v275
        %278 = vset.pattern.permute.xlu0 1
        %279 = vperm.xlu0 %278, %v262
        %v280 = vpop.permute.xlu0 %279
        %v282 = vlaneseq
        %v283 = vshrl.u32 %v282, 7
        %v284 = vsub.s32 1, %v283
        %v285 = vrot.slane %v260, %v284
        %v286 = vlaneseq
        %v287 = vshrl.u32 %v286, 7
        %v288 = vsub.s32 1, %v287
        %v289 = vrot.slane %v261, %v288
        %v290 = vmul.f32 %v280, %v285
        %v291 = vmul.f32 %v280, %v289
        %v292 = vadd.f32 %v276, %v290
        %v293 = vadd.f32 %v277, %v291
        %294 = vset.pattern.permute.xlu0 2
        %295 = vperm.xlu0 %294, %v262
        %v296 = vpop.permute.xlu0 %295
        %v298 = vlaneseq
        %v299 = vshrl.u32 %v298, 7
        %v300 = vsub.s32 2, %v299
        %v301 = vrot.slane %v260, %v300
        %v302 = vlaneseq
        %v303 = vshrl.u32 %v302, 7
        %v304 = vsub.s32 2, %v303
        %v305 = vrot.slane %v261, %v304
        %v306 = vmul.f32 %v296, %v301
        %v307 = vmul.f32 %v296, %v305
        %v308 = vadd.f32 %v292, %v306
        %v309 = vadd.f32 %v293, %v307
        %310 = vset.pattern.permute.xlu0 3
        %311 = vperm.xlu0 %310, %v262
        %v312 = vpop.permute.xlu0 %311
        %v314 = vlaneseq
        %v315 = vshrl.u32 %v314, 7
        %v316 = vsub.s32 3, %v315
        %v317 = vrot.slane %v260, %v316
        %v318 = vlaneseq
        %v319 = vshrl.u32 %v318, 7
        %v320 = vsub.s32 3, %v319
        %v321 = vrot.slane %v261, %v320
        %v322 = vmul.f32 %v312, %v317
        %v323 = vmul.f32 %v312, %v321
        %v324 = vadd.f32 %v308, %v322
        %v325 = vadd.f32 %v309, %v323
        %326 = vset.pattern.permute.xlu0 4
        %327 = vperm.xlu0 %326, %v262
        %v328 = vpop.permute.xlu0 %327
        %v330 = vlaneseq
        %v331 = vshrl.u32 %v330, 7
        %v332 = vsub.s32 4, %v331
        %v333 = vrot.slane %v260, %v332
        %v334 = vlaneseq
        %v335 = vshrl.u32 %v334, 7
        %v336 = vsub.s32 4, %v335
        %v337 = vrot.slane %v261, %v336
        %v338 = vmul.f32 %v328, %v333
        %v339 = vmul.f32 %v328, %v337
        %v340 = vadd.f32 %v324, %v338
        %v341 = vadd.f32 %v325, %v339
        %342 = vset.pattern.permute.xlu0 5
        %343 = vperm.xlu0 %342, %v262
        %v344 = vpop.permute.xlu0 %343
        %v346 = vlaneseq
        %v347 = vshrl.u32 %v346, 7
        %v348 = vsub.s32 5, %v347
        %v349 = vrot.slane %v260, %v348
        %v350 = vlaneseq
        %v351 = vshrl.u32 %v350, 7
        %v352 = vsub.s32 5, %v351
        %v353 = vrot.slane %v261, %v352
        %v354 = vmul.f32 %v344, %v349
        %v355 = vmul.f32 %v344, %v353
        %v356 = vadd.f32 %v340, %v354
        %v357 = vadd.f32 %v341, %v355
        %358 = vset.pattern.permute.xlu0 6
        %359 = vperm.xlu0 %358, %v262
        %v360 = vpop.permute.xlu0 %359
        %v362 = vlaneseq
        %v363 = vshrl.u32 %v362, 7
        %v364 = vsub.s32 6, %v363
        %v365 = vrot.slane %v260, %v364
        %v366 = vlaneseq
        %v367 = vshrl.u32 %v366, 7
        %v368 = vsub.s32 6, %v367
        %v369 = vrot.slane %v261, %v368
        %v370 = vmul.f32 %v360, %v365
        %v371 = vmul.f32 %v360, %v369
        %v372 = vadd.f32 %v356, %v370
        %v373 = vadd.f32 %v357, %v371
        %374 = vset.pattern.permute.xlu0 7
        %375 = vperm.xlu0 %374, %v262
        %v376 = vpop.permute.xlu0 %375
        %v378 = vlaneseq
        %v379 = vshrl.u32 %v378, 7
        %v380 = vsub.s32 7, %v379
        %v381 = vrot.slane %v260, %v380
        %v382 = vlaneseq
        %v383 = vshrl.u32 %v382, 7
        %v384 = vsub.s32 7, %v383
        %v385 = vrot.slane %v261, %v384
        %v386 = vmul.f32 %v376, %v381
        %v387 = vmul.f32 %v376, %v385
        %v388 = vadd.f32 %v372, %v386
        %v389 = vadd.f32 %v373, %v387
        %390 = vst [vmem:[%s231] sm:$0xff] %v388
        %391 = vst [vmem:[%s231 + $0x8] sm:$0xff] %v389
        %s392 = sand.u32 %s134, 1
        %s393 = scalar_lea.sflag [#allocation4], %s392
        %s394 = sand.u32 %s134, 1
        %s395 = smul.addr %s394, 16
        %s396 = scalar_lea.vmem [#allocation5], %s395
        // Predicated region
        $region41: #{tpu_custom_call.1} parent=35 // pred_check
          %p397 = pneg %p144
        $region42: #{tpu_custom_call.1} parent=35 // pred_check_branch
          %399 = sbr.rel (%p397) target = $region44
        $region43: #{tpu_custom_call.1} parent=35 // pred_region
          %s400 = smul.u32 2, %s26
          %s402 = ssub.s32 256, 256
          %403 = vsyncadd %s393, %s402
          %s404 = smul.addr %s25, 2
          %s405 = sadd.s32 %s400, %s404
          %s406 = smul.addr %s405, 128
          %s407 = scalar_lea.hbm %s4, %s406
          %s409 = sshll.u32 %s396, 4
          %s410 = int_to_ptr.vmem [resolvable:$true] %s409
          %412 = dma.vmem_to_hbm [thread:$0]  %s410, 256, %s407, %s393
        $region44: #{tpu_custom_call.1} parent=35 // pred_fallthru
          _
      $region36: #{tpu_custom_call.1} parent=5 // pred_fallthru
        _
      %p413 = scmp.le.s32.totalorder 2, %s16
      // Predicated region
      $region45: #{tpu_custom_call.1} parent=5 // pred_check
        %p414 = pneg %p413
      $region46: #{tpu_custom_call.1} parent=5 // pred_check_branch
        %416 = sbr.rel (%p414) target = $region48
      $region47: #{tpu_custom_call.1} parent=5 // pred_region
        %s417 = ssub.s32 %s16, 2
        // Predicated region
        $region49: #{tpu_custom_call.1} parent=47 // pred_check
          %p418 = pneg %p150
        $region50: #{tpu_custom_call.1} parent=47 // pred_check_branch
          %420 = sbr.rel (%p418) target = $region52
        $region51: #{tpu_custom_call.1} parent=47 // pred_region
          %s421 = sand.u32 %s135, 1
          %s422 = scalar_lea.sflag [#allocation4], %s421
          %s423 = sand.u32 %s135, 1
          %s424 = smul.addr %s423, 16
          %s425 = scalar_lea.vmem [#allocation5], %s424
          %426 = dma.done %s422, 256
        $region52: #{tpu_custom_call.1} parent=47 // pred_fallthru
          _
      $region48: #{tpu_custom_call.1} parent=5 // pred_fallthru
        _
    $region6: #{tpu_custom_call.1} parent=1 // loop_footer
      %s20 = sadd.s32 1, %s16
    $region7: #{tpu_custom_call.1} parent=1 // loop_footer_branch
      %15 = sbr.rel target = $region3
    $region8: #{tpu_custom_call.1} parent=1 // loop_exit
      _
    %427 = vsyncpa [#allocation3], 1
    %s428 = scalar_lea.sflag [#allocation3], 1
    %429 = vsyncpa %s428, 1
    %430 = vsyncpa [#allocation4], 1
    %s431 = scalar_lea.sflag [#allocation4], 1
    %432 = vsyncpa %s431, 1

</llo_original>
